<compile_context>
chip_gen: v5e
topology: v5e:2x2
jax: 0.10.0
libtpu: 0.0.40
codegen_flags: <defaults>
</compile_context>

<pallas_src>
import jax
import jax.numpy as jnp
from jax.experimental import pallas as pl
from jax.experimental.pallas import tpu as pltpu


_LANE = 128          # lane width; slab is exactly one lane tile wide
_BIAS_COL = 127      # bias column inside the [0,128) lane band
_N_TILE = 128        # batch tile (lane axis) when gridding over N


def _round_up(x, m):
    return (x + m - 1) // m * m


# ---------------------------------------------------------------------------
# Kernel factory: fused 3-layer MLP in (D, N) orientation.
#   x_ref: (128, Nt) bf16 -- rows [0,d_in) = input, row 127 = ones (folds b1)
#   p_ref: (rows, 128) bf16 packed slab (weights in lane band, biases col 127)
#   o_ref: (d_out, Nt) f32
# ---------------------------------------------------------------------------
def make_mlp_kernel(d_in, d_h, d_out):
    r1, r2, r3 = 0, d_h, 2 * d_h  # row offsets of the three weight bands

    def kernel(x_ref, p_ref, o_ref):
        x = x_ref[...]                                          # (128, Nt) bf16

        # Layer 1: full-lane-band weight load; b1 sits in column 127 and is
        # picked up by the ones row of x, so the bias add comes out of the MXU.
        w1 = p_ref[r1:r1 + d_h, :]                              # (d_h, 128) bf16
        z1 = jnp.dot(w1, x, preferred_element_type=jnp.float32)
        a1 = jnp.maximum(z1, 0.0)                               # f32

        w2 = p_ref[r2:r2 + d_h, 0:d_h]                          # (d_h, d_h) bf16
        b2 = p_ref[r2:r2 + d_h, _BIAS_COL:_BIAS_COL + 1].astype(jnp.float32)
        z2 = jnp.dot(w2, a1.astype(jnp.bfloat16),
                     preferred_element_type=jnp.float32) + b2
        a2 = jnp.maximum(z2, 0.0)

        w3 = p_ref[r3:r3 + d_out, 0:d_h]                        # (d_out, d_h) bf16
        b3 = p_ref[r3:r3 + d_out, _BIAS_COL:_BIAS_COL + 1].astype(jnp.float32)
        z3 = jnp.dot(w3, a2.astype(jnp.bfloat16),
                     preferred_element_type=jnp.float32) + b3

        # sigmoid(z) = 0.5 * tanh(z/2) + 0.5 -> transcendental on the EUP slot
        o_ref[...] = 0.5 * jnp.tanh(0.5 * z3) + 0.5

    return kernel


# ---------------------------------------------------------------------------
# Setup-time packing of (W, b) x 3 into one 128-lane bf16 slab (done once).
# ---------------------------------------------------------------------------
def pack_params(params, d_in, d_h, d_out):
    (w1, b1), (w2, b2), (w3, b3) = params
    # Layout assumes every weight fits in lanes [0,127) with the bias at 127.
    assert d_in < _LANE and d_h < _LANE and d_out <= _LANE, \
        "packed-slab layout requires d_in, d_h < 128 and d_out <= 128"
    rows = _round_up(2 * d_h + d_out, 16)   # bf16 packs 16 sublanes per vreg
    slab = jnp.zeros((rows, _LANE), jnp.float32)
    slab = slab.at[0:d_h, 0:d_in].set(w1)
    slab = slab.at[0:d_h, _BIAS_COL].set(b1)
    slab = slab.at[d_h:2 * d_h, 0:d_h].set(w2)
    slab = slab.at[d_h:2 * d_h, _BIAS_COL].set(b2)
    slab = slab.at[2 * d_h:2 * d_h + d_out, 0:d_h].set(w3)
    slab = slab.at[2 * d_h:2 * d_h + d_out, _BIAS_COL].set(b3)
    return slab.astype(jnp.bfloat16)


# ---------------------------------------------------------------------------
# Forward: reproduces Net.forward.  x has shape (D_in, N); returns (D_out, N).
# ---------------------------------------------------------------------------
def net_forward(x, packed, d_in, d_h, d_out):
    x = jnp.asarray(x, jnp.float32)          # torch.tensor(input, dtype=float)
    assert x.shape[0] == d_in
    n = x.shape[1]
    n_pad = _round_up(max(n, 1), _LANE)      # lane-dense batch axis

    # Pad rows to one full lane band (128), append the ones row that folds b1
    # into W1, pad N to a multiple of 128, and cast to bf16 for the MXU.
    xp = jnp.zeros((_LANE, n_pad), jnp.float32)
    xp = xp.at[:d_in, :n].set(x)
    xp = xp.at[_BIAS_COL, :].set(1.0)
    xp = xp.astype(jnp.bfloat16)

    kernel = make_mlp_kernel(d_in, d_h, d_out)
    vmem = pl.BlockSpec(memory_space=pltpu.MemorySpace.VMEM)

    if n_pad <= _N_TILE:
        # Single lane tile of batch: grid-free, fully VMEM resident (all chips).
        out = pl.pallas_call(
            kernel,
            out_shape=jax.ShapeDtypeStruct((d_out, n_pad), jnp.float32),
            in_specs=[vmem, vmem],
            out_specs=vmem,
        )(xp, packed)
    else:
        # Larger batches: parallel grid over N tiles (engages v7x's 2nd core;
        # harmless on single-TC v5e/v6e). Weight slab stays resident.
        out = pl.pallas_call(
            kernel,
            out_shape=jax.ShapeDtypeStruct((d_out, n_pad), jnp.float32),
            grid=(n_pad // _N_TILE,),
            in_specs=[pl.BlockSpec((_LANE, _N_TILE), lambda j: (0, j)),
                      pl.BlockSpec(tuple(packed.shape), lambda j: (0, 0))],
            out_specs=pl.BlockSpec((d_out, _N_TILE), lambda j: (0, j)),
            compiler_params=pltpu.CompilerParams(
                dimension_semantics=("parallel",)),
        )(xp, packed)

    return out[:, :n]


# ---------------------------------------------------------------------------
# Parameter setup (plain JAX): spectral normalization via power iteration,
# mirroring torch.nn.utils.spectral_norm's forward-time weight.
# ---------------------------------------------------------------------------
def spectral_normalize(w, key, n_power_iterations=1, eps=1e-12):
    # w: (out_features, in_features), matching torch.nn.Linear.weight
    u = jax.random.normal(key, (w.shape[0],), dtype=jnp.float32)
    u = u / (jnp.linalg.norm(u) + eps)
    v = None
    for _ in range(n_power_iterations):
        v = w.T @ u
        v = v / (jnp.linalg.norm(v) + eps)
        u = w @ v
        u = u / (jnp.linalg.norm(u) + eps)
    sigma = u @ (w @ v)
    return w / sigma


def init_linear(key, d_in, d_out):
    # Deterministic init (shapes match nn.Linear(d_in, d_out)); not a checkpoint load.
    kw, kb = jax.random.split(key)
    bound = 1.0 / jnp.sqrt(d_in)
    w = jax.random.uniform(kw, (d_out, d_in), jnp.float32, -bound, bound)
    b = jax.random.uniform(kb, (d_out,), jnp.float32, -bound, bound)
    return w, b


if __name__ == "__main__":
    D_in, D_h, D_out, N = 16, 32, 8, 8

    key = jax.random.PRNGKey(0)
    k_x, kx2, k1, k2, k3, ks1, ks2, ks3 = jax.random.split(key, 8)

    # Input as the module expects: shape (D_in, N) (it transposes internally).
    x = jax.random.normal(k_x, (D_in, N), dtype=jnp.float32)

    # Parameters with spectral normalization applied (forward-pass weights).
    w1, b1 = init_linear(k1, D_in, D_h)
    w2, b2 = init_linear(k2, D_h, D_h)
    w3, b3 = init_linear(k3, D_h, D_out)
    w1 = spectral_normalize(w1, ks1)
    w2 = spectral_normalize(w2, ks2)
    w3 = spectral_normalize(w3, ks3)
    params = ((w1, b1), (w2, b2), (w3, b3))

    packed = pack_params(params, D_in, D_h, D_out)     # one-time packing
    packed = jax.block_until_ready(packed)

    out = net_forward(x, packed, D_in, D_h, D_out)
    out = jax.block_until_ready(out)

    # Reference in plain JAX mimicking the kernel's bf16 operand casts
    # (bf16 matmul operands, f32 accumulation / bias / activations).
    def ref_bf16(xin):
        bf, f32 = jnp.bfloat16, jnp.float32
        z = jnp.dot(w1.astype(bf), xin.astype(bf),
                    preferred_element_type=f32) + b1.astype(bf).astype(f32)[:, None]
        z = jnp.maximum(z, 0.0)
        z = jnp.dot(w2.astype(bf), z.astype(bf),
                    preferred_element_type=f32) + b2.astype(bf).astype(f32)[:, None]
        z = jnp.maximum(z, 0.0)
        z = jnp.dot(w3.astype(bf), z.astype(bf),
                    preferred_element_type=f32) + b3.astype(bf).astype(f32)[:, None]
        return jax.nn.sigmoid(z)

    # Pure-f32 reference (exact PyTorch-module math) for a loose sanity check.
    def ref_f32(xin):
        s = xin.T
        z = jnp.maximum(s @ w1.T + b1, 0.0)
        z = jnp.maximum(z @ w2.T + b2, 0.0)
        return jax.nn.sigmoid(z @ w3.T + b3).T

    assert out.shape == (D_out, N)
    assert jnp.allclose(out, ref_bf16(x), atol=1e-4, rtol=1e-4)
    assert jnp.allclose(out, ref_f32(x), atol=3e-2, rtol=3e-2)

    # Exercise the batched / gridded path (v7x parallel axis) as well.
    N_big = 256
    x_big = jax.random.normal(kx2, (D_in, N_big), dtype=jnp.float32)
    out_big = jax.block_until_ready(net_forward(x_big, packed, D_in, D_h, D_out))
    assert out_big.shape == (D_out, N_big)
    assert jnp.allclose(out_big, ref_bf16(x_big), atol=1e-4, rtol=1e-4)

    print("KERNEL_OK")
</pallas_src>

<mosaic_0001>
module attributes {stable_mosaic.version = 11 : i64} {
  func.func @kernel(%arg0: memref<128x128xbf16, #tpu.memory_space<vmem>>, %arg1: memref<80x128xbf16, #tpu.memory_space<vmem>>, %arg2: memref<8x128xf32, #tpu.memory_space<vmem>>) attributes {dimension_semantics = [], scalar_prefetch = 0 : i64, scratch_operands = 0 : i64, tpu.core_type = #tpu.core_type<tc>} {
    %c0 = arith.constant 0 : index
    %c0_0 = arith.constant 0 : index
    %0 = vector.load %arg0[%c0, %c0_0] : memref<128x128xbf16, #tpu.memory_space<vmem>>, vector<128x128xbf16>
    %c0_1 = arith.constant 0 : index
    %c0_2 = arith.constant 0 : index
    %1 = vector.load %arg1[%c0_1, %c0_2] : memref<80x128xbf16, #tpu.memory_space<vmem>>, vector<32x128xbf16>
    %cst = arith.constant dense<0.000000e+00> : vector<32x128xf32>
    %2 = tpu.matmul %1, %0, %cst {dimension_numbers = #tpu.dot_dimension_numbers<[1], [0], [0], [1], [0, 0, 1, 1], [], []>} : vector<32x128xbf16>, vector<128x128xbf16>, vector<32x128xf32> -> vector<32x128xf32>
    %cst_3 = arith.constant 0.000000e+00 : f32
    %3 = vector.broadcast %cst_3 : f32 to vector<32x128xf32>
    %4 = arith.maximumf %2, %3 : vector<32x128xf32>
    %c32 = arith.constant 32 : index
    %c0_4 = arith.constant 0 : index
    %5 = vector.load %arg1[%c32, %c0_4] : memref<80x128xbf16, #tpu.memory_space<vmem>>, vector<32x32xbf16>
    %c32_5 = arith.constant 32 : index
    %c127 = arith.constant 127 : index
    %6 = vector.load %arg1[%c32_5, %c127] : memref<80x128xbf16, #tpu.memory_space<vmem>>, vector<32x1xbf16>
    %7 = arith.extf %6 : vector<32x1xbf16> to vector<32x1xf32>
    %8 = arith.truncf %4 : vector<32x128xf32> to vector<32x128xbf16>
    %cst_6 = arith.constant dense<0.000000e+00> : vector<32x128xf32>
    %9 = tpu.matmul %5, %8, %cst_6 {dimension_numbers = #tpu.dot_dimension_numbers<[1], [0], [0], [1], [0, 0, 1, 1], [], []>} : vector<32x32xbf16>, vector<32x128xbf16>, vector<32x128xf32> -> vector<32x128xf32>
    %10 = vector.broadcast %7 : vector<32x1xf32> to vector<32x128xf32>
    %11 = arith.addf %9, %10 : vector<32x128xf32>
    %cst_7 = arith.constant 0.000000e+00 : f32
    %12 = vector.broadcast %cst_7 : f32 to vector<32x128xf32>
    %13 = arith.maximumf %11, %12 : vector<32x128xf32>
    %c64 = arith.constant 64 : index
    %c0_8 = arith.constant 0 : index
    %14 = vector.load %arg1[%c64, %c0_8] : memref<80x128xbf16, #tpu.memory_space<vmem>>, vector<8x32xbf16>
    %c64_9 = arith.constant 64 : index
    %c127_10 = arith.constant 127 : index
    %15 = vector.load %arg1[%c64_9, %c127_10] : memref<80x128xbf16, #tpu.memory_space<vmem>>, vector<8x1xbf16>
    %16 = arith.extf %15 : vector<8x1xbf16> to vector<8x1xf32>
    %17 = arith.truncf %13 : vector<32x128xf32> to vector<32x128xbf16>
    %cst_11 = arith.constant dense<0.000000e+00> : vector<8x128xf32>
    %18 = tpu.matmul %14, %17, %cst_11 {dimension_numbers = #tpu.dot_dimension_numbers<[1], [0], [0], [1], [0, 0, 1, 1], [], []>} : vector<8x32xbf16>, vector<32x128xbf16>, vector<8x128xf32> -> vector<8x128xf32>
    %19 = vector.broadcast %16 : vector<8x1xf32> to vector<8x128xf32>
    %20 = arith.addf %18, %19 : vector<8x128xf32>
    %cst_12 = arith.constant 5.000000e-01 : f32
    %21 = vector.broadcast %cst_12 : f32 to vector<8x128xf32>
    %22 = arith.mulf %21, %20 : vector<8x128xf32>
    %23 = math.tanh %22 : vector<8x128xf32>
    %cst_13 = arith.constant 5.000000e-01 : f32
    %24 = vector.broadcast %cst_13 : f32 to vector<8x128xf32>
    %25 = arith.mulf %24, %23 : vector<8x128xf32>
    %cst_14 = arith.constant 5.000000e-01 : f32
    %26 = vector.broadcast %cst_14 : f32 to vector<8x128xf32>
    %27 = arith.addf %25, %26 : vector<8x128xf32>
    %c0_15 = arith.constant 0 : index
    %c0_16 = arith.constant 0 : index
    %28 = vector.load %arg2[%c0_15, %c0_16] : memref<8x128xf32, #tpu.memory_space<vmem>>, vector<8x128xf32>
    tpu.vector_store %arg2[%c0_15, %c0_16], %27 {strides = array<i32>} : memref<8x128xf32, #tpu.memory_space<vmem>>, vector<8x128xf32>,
    return
  }
}

</mosaic_0001>

<llo_original>
// kernel: tpu_custom_call.1
$region0: #{tpu_custom_call.1}
  #allocation0 [shape = 'u32[]', space=smem, size = 0x4, offset = 0x4, fixed_abs, tag = 'smem constant byte address 0x4 - core index']
  #allocation1 [shape = 'u32[72,128]{1,0:T(1,128)}', space=vmem, size = 0x9000, scoped, tag = 'internal scratch']
  %s0 = inlined_call_operand.hbm [shape: bf16[128,128], index: 0, kind: input, shape index: {}]
  %s1 = inlined_call_operand.hbm [shape: bf16[80,128], index: 1, kind: input, shape index: {}]
  %s2 = inlined_call_operand.hbm [shape: f32[8,128], index: 2, kind: output, shape index: {}]
  %s3 = sld [smem:[#allocation0]]
  $region26: #{tpu_custom_call.1} parent=0
    _
  %s5 = ssub.s32 1, %s3
  %s6 = scalar_select 0, %s5, %s3
  $region1: #{tpu_custom_call.1} parent=0
    #allocation2 [shape = 'u8[32768]{0}', space=vmem, size = 0x8000, scoped, tag = 'input window, operand 0, single buffered']
    #allocation3 [shape = 's32[1]{0}', space=sflag, size = 0x4, scoped, tag = 'scoped memory for tpu_custom_call.1']
    #allocation4 [shape = 's32[1]{0}', space=sflag, size = 0x4, scoped, tag = 'scoped memory for tpu_custom_call.1']
    #allocation5 [shape = 'u8[20480]{0}', space=vmem, size = 0x5000, scoped, tag = 'input window, operand 1, single buffered']
    #allocation6 [shape = 's32[1]{0}', space=sflag, size = 0x4, scoped, tag = 'scoped memory for tpu_custom_call.1']
    #allocation7 [shape = 'u8[4096]{0}', space=vmem, size = 0x1000, scoped, tag = 'output window, operand 0, single buffered']
    %7 = vsyncpa [#allocation3], 0
    %8 = vsyncpa [#allocation6], 0
    %9 = vsyncpa [#allocation4], 0
    // Predicated region
    $region2: #{tpu_custom_call.1} parent=1 // pred_check
      _
    $region3: #{tpu_custom_call.1} parent=1 // pred_check_branch
      %11 = sbr.rel (0) target = $region5
    $region4: #{tpu_custom_call.1} parent=1 // pred_region
      %13 = vsyncadd [#allocation3], 0
      %s14 = sshll.u32 %s0, 4
      %s15 = int_to_ptr.hbm [resolvable:$true] %s14
      %s16 = sshll.u32 [#allocation2], 4
      %s17 = int_to_ptr.vmem [resolvable:$true] %s16
      %22 = dma.hbm_to_vmem [thread:$0]  %s15, 1024, %s17, [#allocation3], 64, 64, 4
    $region5: #{tpu_custom_call.1} parent=1 // pred_fallthru
      _
    // Predicated region
    $region6: #{tpu_custom_call.1} parent=1 // pred_check
      _
    $region7: #{tpu_custom_call.1} parent=1 // pred_check_branch
      %24 = sbr.rel (0) target = $region9
    $region8: #{tpu_custom_call.1} parent=1 // pred_region
      %26 = vsyncadd [#allocation6], 0
      %s27 = sshll.u32 %s1, 4
      %s28 = int_to_ptr.hbm [resolvable:$true] %s27
      %s29 = sshll.u32 [#allocation5], 4
      %s30 = int_to_ptr.vmem [resolvable:$true] %s29
      %35 = dma.hbm_to_vmem [thread:$0]  %s28, 640, %s30, [#allocation6], 64, 64, 4
    $region9: #{tpu_custom_call.1} parent=1 // pred_fallthru
      _
    // Predicated region
    $region10: #{tpu_custom_call.1} parent=1 // pred_check
      _
    $region11: #{tpu_custom_call.1} parent=1 // pred_check_branch
      %37 = sbr.rel (0) target = $region13
    $region12: #{tpu_custom_call.1} parent=1 // pred_region
      %39 = dma.done [#allocation3], 1024
    $region13: #{tpu_custom_call.1} parent=1 // pred_fallthru
      _
    // Predicated region
    $region14: #{tpu_custom_call.1} parent=1 // pred_check
      _
    $region15: #{tpu_custom_call.1} parent=1 // pred_check_branch
      %41 = sbr.rel (0) target = $region17
    $region16: #{tpu_custom_call.1} parent=1 // pred_region
      %43 = dma.done [#allocation6], 640
    $region17: #{tpu_custom_call.1} parent=1 // pred_fallthru
      _
    %v45 = vld [vmem:[#allocation2] sm:$0xf]
    %v46 = vld [vmem:[#allocation2 + $0x4] sm:$0xf]
    %v47 = vld [vmem:[#allocation2 + $0x8] sm:$0xf]
    %v48 = vld [vmem:[#allocation2 + $0xc] sm:$0xf]
    %v49 = vld [vmem:[#allocation2 + $0x10] sm:$0xf]
    %v50 = vld [vmem:[#allocation2 + $0x14] sm:$0xf]
    %v51 = vld [vmem:[#allocation2 + $0x18] sm:$0xf]
    %v52 = vld [vmem:[#allocation2 + $0x1c] sm:$0xf]
    %v53 = vld [vmem:[#allocation2 + $0x20] sm:$0xf]
    %v54 = vld [vmem:[#allocation2 + $0x24] sm:$0xf]
    %v55 = vld [vmem:[#allocation2 + $0x28] sm:$0xf]
    %v56 = vld [vmem:[#allocation2 + $0x2c] sm:$0xf]
    %v57 = vld [vmem:[#allocation2 + $0x30] sm:$0xf]
    %v58 = vld [vmem:[#allocation2 + $0x34] sm:$0xf]
    %v59 = vld [vmem:[#allocation2 + $0x38] sm:$0xf]
    %v60 = vld [vmem:[#allocation2 + $0x3c] sm:$0xf]
    %v61 = vld [vmem:[#allocation5] sm:$0xf]
    %v62 = vld [vmem:[#allocation5 + $0x4] sm:$0xf]
    %v63 = vld [vmem:[#allocation5 + $0x8] sm:$0xf]
    %v64 = vld [vmem:[#allocation5 + $0xc] sm:$0xf]
    %v69 = vunpack.c.l.b16 %v61
    %v70 = vunpack.c.l.b16 %v62
    %v71 = vunpack.c.l.b16 %v63
    %v72 = vunpack.c.l.b16 %v64
    %v73 = vpack.c.b16 %v70, %v69
    %v74 = vpack.c.b16 %v72, %v71
    %v93 = vunpack.c.l.b16 %v45
    %v94 = vunpack.c.l.b16 %v46
    %v95 = vunpack.c.l.b16 %v47
    %v96 = vunpack.c.l.b16 %v48
    %v97 = vunpack.c.l.b16 %v49
    %v98 = vunpack.c.l.b16 %v50
    %v99 = vunpack.c.l.b16 %v51
    %v100 = vunpack.c.l.b16 %v52
    %v101 = vunpack.c.l.b16 %v53
    %v102 = vunpack.c.l.b16 %v54
    %v103 = vunpack.c.l.b16 %v55
    %v104 = vunpack.c.l.b16 %v56
    %v105 = vunpack.c.l.b16 %v57
    %v106 = vunpack.c.l.b16 %v58
    %v107 = vunpack.c.l.b16 %v59
    %v108 = vunpack.c.l.b16 %v60
    %v109 = vpack.c.b16 %v94, %v93
    %v110 = vpack.c.b16 %v96, %v95
    %v111 = vpack.c.b16 %v98, %v97
    %v112 = vpack.c.b16 %v100, %v99
    %v113 = vpack.c.b16 %v102, %v101
    %v114 = vpack.c.b16 %v104, %v103
    %v115 = vpack.c.b16 %v106, %v105
    %v116 = vpack.c.b16 %v108, %v107
    %125 = vmatpush.bf16.msra.mxu0 %v116
    %126 = vmatpush.bf16.msra.mxu0 %v115
    %127 = vmatpush.bf16.msra.mxu0 %v114
    %128 = vmatpush.bf16.msra.mxu0 %v113
    %129 = vmatpush.bf16.msra.mxu0 %v112
    %130 = vmatpush.bf16.msra.mxu0 %v111
    %131 = vmatpush.bf16.msra.mxu0 %v110
    %132 = vmatpush.bf16.msra.mxu0 %v109
    %133 = vmatmul.bf16.gmra.mxu0 %v73
    %v134 = vpop.f32.mrf.mxu0
    %v135 = vadd.f32 0.0, %v134
    %v136 = vpop.f32.mrf.mxu0
    %v137 = vadd.f32 0.0, %v136
    %138 = vmatmul.bf16.gmra.mxu0 %v74
    %v139 = vpop.f32.mrf.mxu0
    %v140 = vadd.f32 0.0, %v139
    %v141 = vpop.f32.mrf.mxu0
    %v142 = vadd.f32 0.0, %v141
    %143 = vdwg.mxu0
    %v144 = vmax.f32 %v135, 0.0
    %v145 = vmax.f32 %v137, 0.0
    %v146 = vmax.f32 %v140, 0.0
    %v147 = vmax.f32 %v142, 0.0
    %v148 = vld [vmem:[#allocation5 + $0x10] sm:$0xf]
    %v149 = vld [vmem:[#allocation5 + $0x14] sm:$0xf]
    %v150 = vld [vmem:[#allocation5 + $0x18] sm:$0xf]
    %v151 = vld [vmem:[#allocation5 + $0x1c] sm:$0xf]
    %v152 = vunpack.c.l.bf16 %v148
    %v153 = vunpack.c.l.bf16 %v149
    %v154 = vunpack.c.l.bf16 %v150
    %v155 = vunpack.c.l.bf16 %v151
    %v156 = vpack.c.bf16 %v145, %v144
    %v157 = vpack.c.bf16 %v147, %v146
    %159 = vset.pattern.permute.xlu0 127
    %160 = vperm.xlu0 %159, %v152
    %v161 = vpop.permute.xlu0 %160
    %164 = vset.pattern.permute.xlu0 127
    %165 = vperm.xlu0 %164, %v153
    %v166 = vpop.permute.xlu0 %165
    %169 = vset.pattern.permute.xlu0 127
    %170 = vperm.xlu0 %169, %v154
    %v171 = vpop.permute.xlu0 %170
    %174 = vset.pattern.permute.xlu0 127
    %175 = vperm.xlu0 %174, %v155
    %v176 = vpop.permute.xlu0 %175
    %v182 = vunpack.c.l.b16 %v148
    %v183 = vunpack.c.l.b16 %v149
    %v184 = vunpack.c.l.b16 %v150
    %v185 = vunpack.c.l.b16 %v151
    %v186 = vpack.c.b16 %v183, %v182
    %v187 = vpack.c.b16 %v185, %v184
    %vm188 = vcmask 261120
    %v190 = vsel %vm188, %v186, 0
    %v193 = vsel %vm188, %v187, 0
    %195 = vmatpush.bf16.msra.mxu0 0
    %196 = vmatpush.bf16.msra.mxu0 0
    %197 = vmatpush.bf16.msra.mxu0 0
    %198 = vmatpush.bf16.msra.mxu0 0
    %199 = vmatpush.bf16.msra.mxu0 0
    %200 = vmatpush.bf16.msra.mxu0 0
    %201 = vmatpush.bf16.msra.mxu0 %v157
    %202 = vmatpush.bf16.msra.mxu0 %v156
    %203 = vmatmul.bf16.gmra.mxu0 %v190
    %v204 = vpop.f32.mrf.mxu0
    %v205 = vadd.f32 %v161, %v204
    %v206 = vpop.f32.mrf.mxu0
    %v207 = vadd.f32 %v166, %v206
    %208 = vmatmul.bf16.gmra.mxu0 %v193
    %v209 = vpop.f32.mrf.mxu0
    %v210 = vadd.f32 %v171, %v209
    %v211 = vpop.f32.mrf.mxu0
    %v212 = vadd.f32 %v176, %v211
    %213 = vdwg.mxu0
    %v214 = vmax.f32 %v205, 0.0
    %v215 = vmax.f32 %v207, 0.0
    %v216 = vmax.f32 %v210, 0.0
    %v217 = vmax.f32 %v212, 0.0
    %v218 = vld [vmem:[#allocation5 + $0x20] sm:$0xf]
    %v219 = vunpack.c.l.bf16 %v218
    %v220 = vpack.c.bf16 %v215, %v214
    %v221 = vpack.c.bf16 %v217, %v216
    %223 = vset.pattern.permute.xlu0 127
    %224 = vperm.xlu0 %223, %v219
    %v225 = vpop.permute.xlu0 %224
    %v228 = vsel %vm188, %v218, 0
    %230 = vmatpush.bf16.msra.mxu0 0
    %231 = vmatpush.bf16.msra.mxu0 0
    %232 = vmatpush.bf16.msra.mxu0 0
    %233 = vmatpush.bf16.msra.mxu0 0
    %234 = vmatpush.bf16.msra.mxu0 0
    %235 = vmatpush.bf16.msra.mxu0 0
    %236 = vmatpush.bf16.msra.mxu0 %v221
    %237 = vmatpush.bf16.msra.mxu0 %v220
    %238 = vmatmul.bf16.gmra.mxu0 %v228
    %v239 = vpop.f32.mrf.mxu0
    %v240 = vadd.f32 %v225, %v239
    %v241 = vpop.f32.mrf.mxu0
    %242 = vdwg.mxu0
    %v243 = vmul.f32 %v240, 0.5
    %v244 = vtanh.pop %v243
    %v245 = vmul.f32 %v244, 0.5
    %v246 = vadd.f32 %v245, 0.5
    %247 = vst [vmem:[#allocation7] sm:$0xff] %v246
    // Predicated region
    $region18: #{tpu_custom_call.1} parent=1 // pred_check
      _
    $region19: #{tpu_custom_call.1} parent=1 // pred_check_branch
      %249 = sbr.rel (0) target = $region21
    $region20: #{tpu_custom_call.1} parent=1 // pred_region
      %251 = vsyncadd [#allocation4], 0
      %s253 = sshll.u32 [#allocation7], 4
      %s254 = int_to_ptr.vmem [resolvable:$true] %s253
      %s255 = sshll.u32 %s2, 4
      %s256 = int_to_ptr.hbm [resolvable:$true] %s255
      %258 = dma.vmem_to_hbm [thread:$0]  %s254, 128, %s256, [#allocation4]
    $region21: #{tpu_custom_call.1} parent=1 // pred_fallthru
      _
    // Predicated region
    $region22: #{tpu_custom_call.1} parent=1 // pred_check
      _
    $region23: #{tpu_custom_call.1} parent=1 // pred_check_branch
      %260 = sbr.rel (0) target = $region25
    $region24: #{tpu_custom_call.1} parent=1 // pred_region
      %262 = dma.done [#allocation4], 128
    $region25: #{tpu_custom_call.1} parent=1 // pred_fallthru
      _
    %263 = vsyncpa [#allocation3], 1
    %264 = vsyncpa [#allocation6], 1
    %265 = vsyncpa [#allocation4], 1

</llo_original>
